<compile_context>
chip_gen: v5e
topology: v5e:2x2
jax: 0.10.0
libtpu: 0.0.40
codegen_flags: <defaults>
</compile_context>

<pallas_src>
import jax
import jax.numpy as jnp
from jax.experimental import pallas as pl
from jax.experimental.pallas import tpu as pltpu

IN_DIM = 7
HID_DIM = 256
OUT_DIM = 4


def _mlp_kernel(x_ref, w1_ref, b1_ref, w2_ref, b2_ref, w3_ref, b3_ref, o_ref):
    x = x_ref[...]                                   # (TB, 7)  f32
    w1 = w1_ref[...]                                 # (7, 256) f32

    # --- fc1 on the VPU: 7 broadcast FMAs over (TB, 256) f32 tiles ----------
    tb = x.shape[0]
    h1 = jnp.broadcast_to(b1_ref[...], (tb, HID_DIM))        # hoisted bias
    for k in range(IN_DIM):                                   # static unroll
        h1 = h1 + x[:, k:k + 1] * w1[k:k + 1, :]
    h1 = jnp.maximum(h1, 0.0)                                 # ReLU
    # dropout #1: identity in eval mode

    # --- fc2 on the MXU in bf16 with f32 accumulation -----------------------
    h2 = jnp.dot(h1.astype(jnp.bfloat16), w2_ref[...],
                 preferred_element_type=jnp.float32)
    h2 = jnp.maximum(h2 + b2_ref[...], 0.0)                   # bias + ReLU (f32)
    # dropout #2: identity in eval mode

    # --- fc3 (K=256, N=4) in f32 (weight is tiny, keep full precision) ------
    out = jnp.dot(h2, w3_ref[...], preferred_element_type=jnp.float32)
    o_ref[...] = out + b3_ref[...]


def dnn_forward(x, params, *, block_b=1024):
    """x: (B, 7) float32. Returns (B, 4) float32."""
    w1, b1, w2, b2, w3, b3 = params
    B, f_in = x.shape
    out_dim = w3.shape[1]

    tb = min(block_b, B)
    grid = (pl.cdiv(B, tb),)

    def const_spec(a):
        # Full-array block, constant index_map -> stays resident in VMEM, no
        # re-DMA across batch-grid iterations.
        return pl.BlockSpec(a.shape, lambda i: (0,) * a.ndim)

    nbytes = lambda a: a.size * a.dtype.itemsize
    cost = pl.CostEstimate(
        flops=2 * B * (IN_DIM * HID_DIM + HID_DIM * HID_DIM + HID_DIM * out_dim),
        transcendentals=0,
        bytes_accessed=(sum(nbytes(a) for a in (w1, b1, w2, b2, w3, b3))
                        + nbytes(x) + B * out_dim * 4),
    )

    return pl.pallas_call(
        _mlp_kernel,
        out_shape=jax.ShapeDtypeStruct((B, out_dim), jnp.float32),
        grid=grid,
        in_specs=[
            pl.BlockSpec((tb, f_in), lambda i: (i, 0)),   # x: batch-tiled
            const_spec(w1), const_spec(b1),
            const_spec(w2), const_spec(b2),
            const_spec(w3), const_spec(b3),
        ],
        out_specs=pl.BlockSpec((tb, out_dim), lambda i: (i, 0)),
        compiler_params=pltpu.CompilerParams(
            dimension_semantics=("parallel",),            # shard batch across TCs
        ),
        cost_estimate=cost,
    )(x, w1, b1, w2, b2, w3, b3)


def init_params(key):
    """Deterministic init mimicking PyTorch nn.Linear defaults:
    uniform(-1/sqrt(fan_in), 1/sqrt(fan_in)) for weight and bias.
    Weights stored as (in, out) so the kernel computes y = x @ W + b.
    fc2's weight is stored in bf16 (halves its HBM footprint/DMA)."""
    def linear_init(k, fan_in, fan_out, w_dtype=jnp.float32):
        kw, kb = jax.random.split(k)
        bound = 1.0 / jnp.sqrt(jnp.float32(fan_in))
        w = jax.random.uniform(kw, (fan_in, fan_out), jnp.float32, -bound, bound)
        b = jax.random.uniform(kb, (1, fan_out), jnp.float32, -bound, bound)
        return w.astype(w_dtype), b

    k1, k2, k3 = jax.random.split(key, 3)
    w1, b1 = linear_init(k1, IN_DIM, HID_DIM)                       # f32 (7 KB)
    w2, b2 = linear_init(k2, HID_DIM, HID_DIM, w_dtype=jnp.bfloat16)  # bf16
    w3, b3 = linear_init(k3, HID_DIM, OUT_DIM)                      # f32 (4 KB)
    return (w1, b1, w2, b2, w3, b3)


def _reference(x, params):
    # Pure-JAX reference matching the kernel's precision choices
    # (fc2 in bf16 with f32 accumulation; dropout = identity in eval mode).
    w1, b1, w2, b2, w3, b3 = params
    h1 = jnp.maximum(x @ w1 + b1, 0.0)
    h2 = jnp.dot(h1.astype(jnp.bfloat16), w2, preferred_element_type=jnp.float32)
    h2 = jnp.maximum(h2 + b2, 0.0)
    return jnp.dot(h2, w3, preferred_element_type=jnp.float32) + b3


if __name__ == "__main__":
    key = jax.random.PRNGKey(0)
    k_params, k_x, k_x2 = jax.random.split(key, 3)

    params = init_params(k_params)

    # --- small primary test: batch=8, features=7 ----------------------------
    x = jax.random.normal(k_x, (8, IN_DIM), jnp.float32)
    out = dnn_forward(x, params)
    jax.block_until_ready(out)
    assert out.shape == (8, OUT_DIM), out.shape
    assert out.dtype == jnp.float32
    ref = _reference(x, params)
    assert jnp.allclose(out, ref, atol=1e-2, rtol=1e-2), \
        float(jnp.max(jnp.abs(out - ref)))

    # --- exercise the batch grid (multiple tiles + a partial last tile) -----
    x2 = jax.random.normal(k_x2, (300, IN_DIM), jnp.float32)
    out2 = dnn_forward(x2, params, block_b=128)   # grid = 3, last tile partial
    jax.block_until_ready(out2)
    ref2 = _reference(x2, params)
    assert out2.shape == (300, OUT_DIM)
    assert jnp.allclose(out2, ref2, atol=1e-2, rtol=1e-2), \
        float(jnp.max(jnp.abs(out2 - ref2)))

    print("KERNEL_OK")
</pallas_src>

<mosaic_0001>
module attributes {stable_mosaic.version = 11 : i64} {
  func.func @_mlp_kernel(%arg0: i32, %arg1: memref<8x7xf32, #tpu.memory_space<vmem>>, %arg2: memref<7x256xf32, #tpu.memory_space<vmem>>, %arg3: memref<1x256xf32, #tpu.memory_space<vmem>>, %arg4: memref<256x256xbf16, #tpu.memory_space<vmem>>, %arg5: memref<1x256xf32, #tpu.memory_space<vmem>>, %arg6: memref<256x4xf32, #tpu.memory_space<vmem>>, %arg7: memref<1x4xf32, #tpu.memory_space<vmem>>, %arg8: memref<8x4xf32, #tpu.memory_space<vmem>>) attributes {dimension_semantics = [#tpu.dimension_semantics<parallel>], iteration_bounds = array<i64: 1>, scalar_prefetch = 0 : i64, scratch_operands = 0 : i64, tpu.core_type = #tpu.core_type<tc>, window_params = [{transform_indices = @transform_0, window_bounds = array<i64: 8, 7>}, {pipeline_mode = #tpu.pipeline_mode<synchronous>, transform_indices = @transform_1, window_bounds = array<i64: 7, 256>}, {pipeline_mode = #tpu.pipeline_mode<synchronous>, transform_indices = @transform_2, window_bounds = array<i64: 1, 256>}, {pipeline_mode = #tpu.pipeline_mode<synchronous>, transform_indices = @transform_3, window_bounds = array<i64: 256, 256>}, {pipeline_mode = #tpu.pipeline_mode<synchronous>, transform_indices = @transform_4, window_bounds = array<i64: 1, 256>}, {pipeline_mode = #tpu.pipeline_mode<synchronous>, transform_indices = @transform_5, window_bounds = array<i64: 256, 4>}, {pipeline_mode = #tpu.pipeline_mode<synchronous>, transform_indices = @transform_6, window_bounds = array<i64: 1, 4>}, {transform_indices = @transform_7, window_bounds = array<i64: 8, 4>}]} {
    %c0 = arith.constant 0 : index
    %c0_0 = arith.constant 0 : index
    %0 = vector.load %arg1[%c0, %c0_0] : memref<8x7xf32, #tpu.memory_space<vmem>>, vector<8x7xf32>
    %c0_1 = arith.constant 0 : index
    %c0_2 = arith.constant 0 : index
    %1 = vector.load %arg2[%c0_1, %c0_2] : memref<7x256xf32, #tpu.memory_space<vmem>>, vector<7x256xf32>
    %c0_3 = arith.constant 0 : index
    %c0_4 = arith.constant 0 : index
    %2 = vector.load %arg3[%c0_3, %c0_4] : memref<1x256xf32, #tpu.memory_space<vmem>>, vector<1x256xf32>
    %3 = vector.shape_cast %2 : vector<1x256xf32> to vector<1x256xf32>
    %4 = vector.broadcast %3 : vector<1x256xf32> to vector<8x256xf32>
    %5 = vector.extract_strided_slice %0 {offsets = [0, 0], sizes = [8, 1], strides = [1, 1]} : vector<8x7xf32> to vector<8x1xf32>
    %6 = vector.extract_strided_slice %1 {offsets = [0, 0], sizes = [1, 256], strides = [1, 1]} : vector<7x256xf32> to vector<1x256xf32>
    %7 = vector.broadcast %5 : vector<8x1xf32> to vector<8x256xf32>
    %8 = vector.broadcast %6 : vector<1x256xf32> to vector<8x256xf32>
    %9 = arith.mulf %7, %8 : vector<8x256xf32>
    %10 = arith.addf %4, %9 : vector<8x256xf32>
    %11 = vector.extract_strided_slice %0 {offsets = [0, 1], sizes = [8, 1], strides = [1, 1]} : vector<8x7xf32> to vector<8x1xf32>
    %12 = vector.extract_strided_slice %1 {offsets = [1, 0], sizes = [1, 256], strides = [1, 1]} : vector<7x256xf32> to vector<1x256xf32>
    %13 = vector.broadcast %11 : vector<8x1xf32> to vector<8x256xf32>
    %14 = vector.broadcast %12 : vector<1x256xf32> to vector<8x256xf32>
    %15 = arith.mulf %13, %14 : vector<8x256xf32>
    %16 = arith.addf %10, %15 : vector<8x256xf32>
    %17 = vector.extract_strided_slice %0 {offsets = [0, 2], sizes = [8, 1], strides = [1, 1]} : vector<8x7xf32> to vector<8x1xf32>
    %18 = vector.extract_strided_slice %1 {offsets = [2, 0], sizes = [1, 256], strides = [1, 1]} : vector<7x256xf32> to vector<1x256xf32>
    %19 = vector.broadcast %17 : vector<8x1xf32> to vector<8x256xf32>
    %20 = vector.broadcast %18 : vector<1x256xf32> to vector<8x256xf32>
    %21 = arith.mulf %19, %20 : vector<8x256xf32>
    %22 = arith.addf %16, %21 : vector<8x256xf32>
    %23 = vector.extract_strided_slice %0 {offsets = [0, 3], sizes = [8, 1], strides = [1, 1]} : vector<8x7xf32> to vector<8x1xf32>
    %24 = vector.extract_strided_slice %1 {offsets = [3, 0], sizes = [1, 256], strides = [1, 1]} : vector<7x256xf32> to vector<1x256xf32>
    %25 = vector.broadcast %23 : vector<8x1xf32> to vector<8x256xf32>
    %26 = vector.broadcast %24 : vector<1x256xf32> to vector<8x256xf32>
    %27 = arith.mulf %25, %26 : vector<8x256xf32>
    %28 = arith.addf %22, %27 : vector<8x256xf32>
    %29 = vector.extract_strided_slice %0 {offsets = [0, 4], sizes = [8, 1], strides = [1, 1]} : vector<8x7xf32> to vector<8x1xf32>
    %30 = vector.extract_strided_slice %1 {offsets = [4, 0], sizes = [1, 256], strides = [1, 1]} : vector<7x256xf32> to vector<1x256xf32>
    %31 = vector.broadcast %29 : vector<8x1xf32> to vector<8x256xf32>
    %32 = vector.broadcast %30 : vector<1x256xf32> to vector<8x256xf32>
    %33 = arith.mulf %31, %32 : vector<8x256xf32>
    %34 = arith.addf %28, %33 : vector<8x256xf32>
    %35 = vector.extract_strided_slice %0 {offsets = [0, 5], sizes = [8, 1], strides = [1, 1]} : vector<8x7xf32> to vector<8x1xf32>
    %36 = vector.extract_strided_slice %1 {offsets = [5, 0], sizes = [1, 256], strides = [1, 1]} : vector<7x256xf32> to vector<1x256xf32>
    %37 = vector.broadcast %35 : vector<8x1xf32> to vector<8x256xf32>
    %38 = vector.broadcast %36 : vector<1x256xf32> to vector<8x256xf32>
    %39 = arith.mulf %37, %38 : vector<8x256xf32>
    %40 = arith.addf %34, %39 : vector<8x256xf32>
    %41 = vector.extract_strided_slice %0 {offsets = [0, 6], sizes = [8, 1], strides = [1, 1]} : vector<8x7xf32> to vector<8x1xf32>
    %42 = vector.extract_strided_slice %1 {offsets = [6, 0], sizes = [1, 256], strides = [1, 1]} : vector<7x256xf32> to vector<1x256xf32>
    %43 = vector.broadcast %41 : vector<8x1xf32> to vector<8x256xf32>
    %44 = vector.broadcast %42 : vector<1x256xf32> to vector<8x256xf32>
    %45 = arith.mulf %43, %44 : vector<8x256xf32>
    %46 = arith.addf %40, %45 : vector<8x256xf32>
    %cst = arith.constant 0.000000e+00 : f32
    %47 = vector.broadcast %cst : f32 to vector<8x256xf32>
    %48 = arith.maximumf %46, %47 : vector<8x256xf32>
    %49 = arith.truncf %48 : vector<8x256xf32> to vector<8x256xbf16>
    %c0_5 = arith.constant 0 : index
    %c0_6 = arith.constant 0 : index
    %50 = vector.load %arg4[%c0_5, %c0_6] : memref<256x256xbf16, #tpu.memory_space<vmem>>, vector<256x256xbf16>
    %cst_7 = arith.constant dense<0.000000e+00> : vector<8x256xf32>
    %51 = tpu.matmul %49, %50, %cst_7 {dimension_numbers = #tpu.dot_dimension_numbers<[1], [0], [0], [1], [0, 0, 1, 1], [], []>} : vector<8x256xbf16>, vector<256x256xbf16>, vector<8x256xf32> -> vector<8x256xf32>
    %c0_8 = arith.constant 0 : index
    %c0_9 = arith.constant 0 : index
    %52 = vector.load %arg5[%c0_8, %c0_9] : memref<1x256xf32, #tpu.memory_space<vmem>>, vector<1x256xf32>
    %53 = vector.broadcast %52 : vector<1x256xf32> to vector<8x256xf32>
    %54 = arith.addf %51, %53 : vector<8x256xf32>
    %cst_10 = arith.constant 0.000000e+00 : f32
    %55 = vector.broadcast %cst_10 : f32 to vector<8x256xf32>
    %56 = arith.maximumf %54, %55 : vector<8x256xf32>
    %c0_11 = arith.constant 0 : index
    %c0_12 = arith.constant 0 : index
    %57 = vector.load %arg6[%c0_11, %c0_12] : memref<256x4xf32, #tpu.memory_space<vmem>>, vector<256x4xf32>
    %cst_13 = arith.constant dense<0.000000e+00> : vector<8x4xf32>
    %58 = tpu.matmul %56, %57, %cst_13 {dimension_numbers = #tpu.dot_dimension_numbers<[1], [0], [0], [1], [0, 0, 1, 1], [], []>} : vector<8x256xf32>, vector<256x4xf32>, vector<8x4xf32> -> vector<8x4xf32>
    %c0_14 = arith.constant 0 : index
    %c0_15 = arith.constant 0 : index
    %59 = vector.load %arg7[%c0_14, %c0_15] : memref<1x4xf32, #tpu.memory_space<vmem>>, vector<1x4xf32>
    %60 = vector.broadcast %59 : vector<1x4xf32> to vector<8x4xf32>
    %61 = arith.addf %58, %60 : vector<8x4xf32>
    %c0_16 = arith.constant 0 : index
    %c0_17 = arith.constant 0 : index
    %62 = vector.load %arg8[%c0_16, %c0_17] : memref<8x4xf32, #tpu.memory_space<vmem>>, vector<8x4xf32>
    tpu.vector_store %arg8[%c0_16, %c0_17], %61 {strides = array<i32>} : memref<8x4xf32, #tpu.memory_space<vmem>>, vector<8x4xf32>,
    return
  }
  func.func @transform_0(%arg0: i32) -> (i32, i32) {
    %c0_i32 = arith.constant 0 : i32
    %c0_i32_0 = arith.constant 0 : i32
    return %arg0, %c0_i32 : i32, i32
  }
  func.func @transform_1(%arg0: i32) -> (i32, i32) {
    %c0_i32 = arith.constant 0 : i32
    %c0_i32_0 = arith.constant 0 : i32
    %c0_i32_1 = arith.constant 0 : i32
    return %c0_i32, %c0_i32_0 : i32, i32
  }
  func.func @transform_2(%arg0: i32) -> (i32, i32) {
    %c0_i32 = arith.constant 0 : i32
    %c0_i32_0 = arith.constant 0 : i32
    %c0_i32_1 = arith.constant 0 : i32
    return %c0_i32, %c0_i32_0 : i32, i32
  }
  func.func @transform_3(%arg0: i32) -> (i32, i32) {
    %c0_i32 = arith.constant 0 : i32
    %c0_i32_0 = arith.constant 0 : i32
    %c0_i32_1 = arith.constant 0 : i32
    return %c0_i32, %c0_i32_0 : i32, i32
  }
  func.func @transform_4(%arg0: i32) -> (i32, i32) {
    %c0_i32 = arith.constant 0 : i32
    %c0_i32_0 = arith.constant 0 : i32
    %c0_i32_1 = arith.constant 0 : i32
    return %c0_i32, %c0_i32_0 : i32, i32
  }
  func.func @transform_5(%arg0: i32) -> (i32, i32) {
    %c0_i32 = arith.constant 0 : i32
    %c0_i32_0 = arith.constant 0 : i32
    %c0_i32_1 = arith.constant 0 : i32
    return %c0_i32, %c0_i32_0 : i32, i32
  }
  func.func @transform_6(%arg0: i32) -> (i32, i32) {
    %c0_i32 = arith.constant 0 : i32
    %c0_i32_0 = arith.constant 0 : i32
    %c0_i32_1 = arith.constant 0 : i32
    return %c0_i32, %c0_i32_0 : i32, i32
  }
  func.func @transform_7(%arg0: i32) -> (i32, i32) {
    %c0_i32 = arith.constant 0 : i32
    %c0_i32_0 = arith.constant 0 : i32
    return %arg0, %c0_i32 : i32, i32
  }
}

</mosaic_0001>

<llo_original>
// kernel: tpu_custom_call.1
$region0: #{tpu_custom_call.1}
  #allocation0 [shape = 'u32[]', space=smem, size = 0x4, offset = 0x4, fixed_abs, tag = 'smem constant byte address 0x4 - core index']
  #allocation1 [shape = 'u32[72,128]{1,0:T(1,128)}', space=vmem, size = 0x9000, scoped, tag = 'internal scratch']
  %s0 = inlined_call_operand.vmem [shape: f32[8,7], index: 0, kind: input, shape index: {}]
  %s1 = inlined_call_operand.hbm [shape: f32[7,256], index: 1, kind: input, shape index: {}]
  %s2 = inlined_call_operand.vmem [shape: f32[1,256], index: 2, kind: input, shape index: {}]
  %s3 = inlined_call_operand.vmem [shape: bf16[256,256], index: 3, kind: input, shape index: {}]
  %s4 = inlined_call_operand.hbm [shape: f32[1,256], index: 4, kind: input, shape index: {}]
  %s5 = inlined_call_operand.vmem [shape: f32[256,4], index: 5, kind: input, shape index: {}]
  %s6 = inlined_call_operand.vmem [shape: f32[1,4], index: 6, kind: input, shape index: {}]
  %s7 = inlined_call_operand.vmem [shape: f32[8,4], index: 7, kind: output, shape index: {}]
  %s8 = sld [smem:[#allocation0]]
  $region46: #{tpu_custom_call.1} parent=0
    _
  %s10 = ssub.s32 1, %s8
  %s11 = scalar_select 0, %s10, %s8
  $region1: #{tpu_custom_call.1} parent=0
    #allocation2 [shape = 'u8[8192]{0}', space=vmem, size = 0x2000, scoped, tag = 'input window, operand 1, single buffered']
    #allocation3 [shape = 's32[1]{0}', space=sflag, size = 0x4, scoped, tag = 'scoped memory for tpu_custom_call.1']
    #allocation4 [shape = 'u8[1024]{0}', space=vmem, size = 0x400, scoped, tag = 'input window, operand 4, single buffered']
    #allocation5 [shape = 's32[1]{0}', space=sflag, size = 0x4, scoped, tag = 'scoped memory for tpu_custom_call.1']
    %12 = vsyncpa [#allocation3], 0
    %13 = vsyncpa [#allocation5], 0
    // Predicated region
    $region2: #{tpu_custom_call.1} parent=1 // pred_check
      _
    $region3: #{tpu_custom_call.1} parent=1 // pred_check_branch
      %15 = sbr.rel (0) target = $region5
    $region4: #{tpu_custom_call.1} parent=1 // pred_region
      _
    $region5: #{tpu_custom_call.1} parent=1 // pred_fallthru
      _
    // Predicated region
    $region6: #{tpu_custom_call.1} parent=1 // pred_check
      _
    $region7: #{tpu_custom_call.1} parent=1 // pred_check_branch
      %17 = sbr.rel (0) target = $region9
    $region8: #{tpu_custom_call.1} parent=1 // pred_region
      %19 = vsyncadd [#allocation3], 0
      %s21 = sshll.u32 %s1, 4
      %s22 = int_to_ptr.hbm [resolvable:$true] %s21
      %s23 = sshll.u32 [#allocation2], 4
      %s24 = int_to_ptr.vmem [resolvable:$true] %s23
      %26 = dma.hbm_to_vmem [thread:$0]  %s22, 256, %s24, [#allocation3]
    $region9: #{tpu_custom_call.1} parent=1 // pred_fallthru
      _
    // Predicated region
    $region10: #{tpu_custom_call.1} parent=1 // pred_check
      _
    $region11: #{tpu_custom_call.1} parent=1 // pred_check_branch
      %28 = sbr.rel (0) target = $region13
    $region12: #{tpu_custom_call.1} parent=1 // pred_region
      _
    $region13: #{tpu_custom_call.1} parent=1 // pred_fallthru
      _
    // Predicated region
    $region14: #{tpu_custom_call.1} parent=1 // pred_check
      _
    $region15: #{tpu_custom_call.1} parent=1 // pred_check_branch
      %30 = sbr.rel (0) target = $region17
    $region16: #{tpu_custom_call.1} parent=1 // pred_region
      _
    $region17: #{tpu_custom_call.1} parent=1 // pred_fallthru
      _
    // Predicated region
    $region18: #{tpu_custom_call.1} parent=1 // pred_check
      _
    $region19: #{tpu_custom_call.1} parent=1 // pred_check_branch
      %32 = sbr.rel (0) target = $region21
    $region20: #{tpu_custom_call.1} parent=1 // pred_region
      %34 = vsyncadd [#allocation5], 0
      %s36 = sshll.u32 %s4, 4
      %s37 = int_to_ptr.hbm [resolvable:$true] %s36
      %s38 = sshll.u32 [#allocation4], 4
      %s39 = int_to_ptr.vmem [resolvable:$true] %s38
      %41 = dma.hbm_to_vmem [thread:$0]  %s37, 32, %s39, [#allocation5]
    $region21: #{tpu_custom_call.1} parent=1 // pred_fallthru
      _
    // Predicated region
    $region22: #{tpu_custom_call.1} parent=1 // pred_check
      _
    $region23: #{tpu_custom_call.1} parent=1 // pred_check_branch
      %43 = sbr.rel (0) target = $region25
    $region24: #{tpu_custom_call.1} parent=1 // pred_region
      _
    $region25: #{tpu_custom_call.1} parent=1 // pred_fallthru
      _
    // Predicated region
    $region26: #{tpu_custom_call.1} parent=1 // pred_check
      _
    $region27: #{tpu_custom_call.1} parent=1 // pred_check_branch
      %45 = sbr.rel (0) target = $region29
    $region28: #{tpu_custom_call.1} parent=1 // pred_region
      _
    $region29: #{tpu_custom_call.1} parent=1 // pred_fallthru
      _
    // Predicated region
    $region30: #{tpu_custom_call.1} parent=1 // pred_check
      _
    $region31: #{tpu_custom_call.1} parent=1 // pred_check_branch
      %47 = sbr.rel (0) target = $region33
    $region32: #{tpu_custom_call.1} parent=1 // pred_region
      %49 = dma.done [#allocation3], 256
    $region33: #{tpu_custom_call.1} parent=1 // pred_fallthru
      _
    // Predicated region
    $region34: #{tpu_custom_call.1} parent=1 // pred_check
      _
    $region35: #{tpu_custom_call.1} parent=1 // pred_check_branch
      %51 = sbr.rel (0) target = $region37
    $region36: #{tpu_custom_call.1} parent=1 // pred_region
      %53 = dma.done [#allocation5], 32
    $region37: #{tpu_custom_call.1} parent=1 // pred_fallthru
      _
    %v54 = vld [vmem:[%s0] sm:$0xff]
    %v55 = vld [vmem:[#allocation2] sm:$0x7f]
    %v56 = vld [vmem:[#allocation2 + $0x8] sm:$0x7f]
    %v57 = vld [vmem:[%s2] sm:$0x3]
    %v59 = vperm.slane %v57, 0
    %v60 = vperm.slane %v57, 1
    %64 = vset.pattern.permute.xlu0 0
    %65 = vperm.xlu0 %64, %v54
    %v66 = vpop.permute.xlu0 %65
    %v68 = vperm.slane %v55, 0
    %v69 = vperm.slane %v56, 0
    %v70 = vmul.f32 %v66, %v68
    %v71 = vmul.f32 %v66, %v69
    %v72 = vadd.f32 %v59, %v70
    %v73 = vadd.f32 %v60, %v71
    %74 = vset.pattern.permute.xlu0 1
    %75 = vperm.xlu0 %74, %v54
    %v76 = vpop.permute.xlu0 %75
    %v78 = vperm.slane %v55, 1
    %v79 = vperm.slane %v56, 1
    %v80 = vmul.f32 %v76, %v78
    %v81 = vmul.f32 %v76, %v79
    %v82 = vadd.f32 %v72, %v80
    %v83 = vadd.f32 %v73, %v81
    %84 = vset.pattern.permute.xlu0 2
    %85 = vperm.xlu0 %84, %v54
    %v86 = vpop.permute.xlu0 %85
    %v88 = vperm.slane %v55, 2
    %v89 = vperm.slane %v56, 2
    %v90 = vmul.f32 %v86, %v88
    %v91 = vmul.f32 %v86, %v89
    %v92 = vadd.f32 %v82, %v90
    %v93 = vadd.f32 %v83, %v91
    %94 = vset.pattern.permute.xlu0 3
    %95 = vperm.xlu0 %94, %v54
    %v96 = vpop.permute.xlu0 %95
    %v98 = vperm.slane %v55, 3
    %v99 = vperm.slane %v56, 3
    %v100 = vmul.f32 %v96, %v98
    %v101 = vmul.f32 %v96, %v99
    %v102 = vadd.f32 %v92, %v100
    %v103 = vadd.f32 %v93, %v101
    %104 = vset.pattern.permute.xlu0 4
    %105 = vperm.xlu0 %104, %v54
    %v106 = vpop.permute.xlu0 %105
    %v108 = vperm.slane %v55, 4
    %v109 = vperm.slane %v56, 4
    %v110 = vmul.f32 %v106, %v108
    %v111 = vmul.f32 %v106, %v109
    %v112 = vadd.f32 %v102, %v110
    %v113 = vadd.f32 %v103, %v111
    %114 = vset.pattern.permute.xlu0 5
    %115 = vperm.xlu0 %114, %v54
    %v116 = vpop.permute.xlu0 %115
    %v118 = vperm.slane %v55, 5
    %v119 = vperm.slane %v56, 5
    %v120 = vmul.f32 %v116, %v118
    %v121 = vmul.f32 %v116, %v119
    %v122 = vadd.f32 %v112, %v120
    %v123 = vadd.f32 %v113, %v121
    %124 = vset.pattern.permute.xlu0 6
    %125 = vperm.xlu0 %124, %v54
    %v126 = vpop.permute.xlu0 %125
    %v128 = vperm.slane %v55, 6
    %v129 = vperm.slane %v56, 6
    %v130 = vmul.f32 %v126, %v128
    %v131 = vmul.f32 %v126, %v129
    %v132 = vadd.f32 %v122, %v130
    %v133 = vadd.f32 %v123, %v131
    %v134 = vmax.f32 %v132, 0.0
    %v135 = vmax.f32 %v133, 0.0
    %v136 = vpack.c.bf16 %v134, %v134
    %v137 = vpack.c.bf16 %v135, %v135
    %v138 = vld [vmem:[%s3] sm:$0xff]
    %v139 = vld [vmem:[%s3 + $0x8] sm:$0xff]
    %v140 = vld [vmem:[%s3 + $0x10] sm:$0xff]
    %v141 = vld [vmem:[%s3 + $0x18] sm:$0xff]
    %v142 = vld [vmem:[%s3 + $0x20] sm:$0xff]
    %v143 = vld [vmem:[%s3 + $0x28] sm:$0xff]
    %v144 = vld [vmem:[%s3 + $0x30] sm:$0xff]
    %v145 = vld [vmem:[%s3 + $0x38] sm:$0xff]
    %v146 = vld [vmem:[%s3 + $0x40] sm:$0xff]
    %v147 = vld [vmem:[%s3 + $0x48] sm:$0xff]
    %v148 = vld [vmem:[%s3 + $0x50] sm:$0xff]
    %v149 = vld [vmem:[%s3 + $0x58] sm:$0xff]
    %v150 = vld [vmem:[%s3 + $0x60] sm:$0xff]
    %v151 = vld [vmem:[%s3 + $0x68] sm:$0xff]
    %v152 = vld [vmem:[%s3 + $0x70] sm:$0xff]
    %v153 = vld [vmem:[%s3 + $0x78] sm:$0xff]
    %v154 = vld [vmem:[%s3 + $0x80] sm:$0xff]
    %v155 = vld [vmem:[%s3 + $0x88] sm:$0xff]
    %v156 = vld [vmem:[%s3 + $0x90] sm:$0xff]
    %v157 = vld [vmem:[%s3 + $0x98] sm:$0xff]
    %v158 = vld [vmem:[%s3 + $0xa0] sm:$0xff]
    %v159 = vld [vmem:[%s3 + $0xa8] sm:$0xff]
    %v160 = vld [vmem:[%s3 + $0xb0] sm:$0xff]
    %v161 = vld [vmem:[%s3 + $0xb8] sm:$0xff]
    %v162 = vld [vmem:[%s3 + $0xc0] sm:$0xff]
    %v163 = vld [vmem:[%s3 + $0xc8] sm:$0xff]
    %v164 = vld [vmem:[%s3 + $0xd0] sm:$0xff]
    %v165 = vld [vmem:[%s3 + $0xd8] sm:$0xff]
    %v166 = vld [vmem:[%s3 + $0xe0] sm:$0xff]
    %v167 = vld [vmem:[%s3 + $0xe8] sm:$0xff]
    %v168 = vld [vmem:[%s3 + $0xf0] sm:$0xff]
    %v169 = vld [vmem:[%s3 + $0xf8] sm:$0xff]
    %v170 = vld [vmem:[#allocation4] sm:$0x3]
    %v172 = vperm.slane %v170, 0
    %v173 = vperm.slane %v170, 1
    %v208 = vunpack.c.l.b16 %v138
    %v209 = vunpack.c.h.b16 %v138
    %v210 = vunpack.c.l.b16 %v139
    %v211 = vunpack.c.h.b16 %v139
    %v212 = vunpack.c.l.b16 %v140
    %v213 = vunpack.c.h.b16 %v140
    %v214 = vunpack.c.l.b16 %v141
    %v215 = vunpack.c.h.b16 %v141
    %v216 = vunpack.c.l.b16 %v142
    %v217 = vunpack.c.h.b16 %v142
    %v218 = vunpack.c.l.b16 %v143
    %v219 = vunpack.c.h.b16 %v143
    %v220 = vunpack.c.l.b16 %v144
    %v221 = vunpack.c.h.b16 %v144
    %v222 = vunpack.c.l.b16 %v145
    %v223 = vunpack.c.h.b16 %v145
    %v224 = vunpack.c.l.b16 %v146
    %v225 = vunpack.c.h.b16 %v146
    %v226 = vunpack.c.l.b16 %v147
    %v227 = vunpack.c.h.b16 %v147
    %v228 = vunpack.c.l.b16 %v148
    %v229 = vunpack.c.h.b16 %v148
    %v230 = vunpack.c.l.b16 %v149
    %v231 = vunpack.c.h.b16 %v149
    %v232 = vunpack.c.l.b16 %v150
    %v233 = vunpack.c.h.b16 %v150
    %v234 = vunpack.c.l.b16 %v151
    %v235 = vunpack.c.h.b16 %v151
    %v236 = vunpack.c.l.b16 %v152
    %v237 = vunpack.c.h.b16 %v152
    %v238 = vunpack.c.l.b16 %v153
    %v239 = vunpack.c.h.b16 %v153
    %v240 = vunpack.c.l.b16 %v154
    %v241 = vunpack.c.h.b16 %v154
    %v242 = vunpack.c.l.b16 %v155
    %v243 = vunpack.c.h.b16 %v155
    %v244 = vunpack.c.l.b16 %v156
    %v245 = vunpack.c.h.b16 %v156
    %v246 = vunpack.c.l.b16 %v157
    %v247 = vunpack.c.h.b16 %v157
    %v248 = vunpack.c.l.b16 %v158
    %v249 = vunpack.c.h.b16 %v158
    %v250 = vunpack.c.l.b16 %v159
    %v251 = vunpack.c.h.b16 %v159
    %v252 = vunpack.c.l.b16 %v160
    %v253 = vunpack.c.h.b16 %v160
    %v254 = vunpack.c.l.b16 %v161
    %v255 = vunpack.c.h.b16 %v161
    %v256 = vunpack.c.l.b16 %v162
    %v257 = vunpack.c.h.b16 %v162
    %v258 = vunpack.c.l.b16 %v163
    %v259 = vunpack.c.h.b16 %v163
    %v260 = vunpack.c.l.b16 %v164
    %v261 = vunpack.c.h.b16 %v164
    %v262 = vunpack.c.l.b16 %v165
    %v263 = vunpack.c.h.b16 %v165
    %v264 = vunpack.c.l.b16 %v166
    %v265 = vunpack.c.h.b16 %v166
    %v266 = vunpack.c.l.b16 %v167
    %v267 = vunpack.c.h.b16 %v167
    %v268 = vunpack.c.l.b16 %v168
    %v269 = vunpack.c.h.b16 %v168
    %v270 = vunpack.c.l.b16 %v169
    %v271 = vunpack.c.h.b16 %v169
    %v272 = vpack.c.b16 %v210, %v208
    %v273 = vpack.c.b16 %v211, %v209
    %v274 = vpack.c.b16 %v214, %v212
    %v275 = vpack.c.b16 %v215, %v213
    %v276 = vpack.c.b16 %v218, %v216
    %v277 = vpack.c.b16 %v219, %v217
    %v278 = vpack.c.b16 %v222, %v220
    %v279 = vpack.c.b16 %v223, %v221
    %v280 = vpack.c.b16 %v226, %v224
    %v281 = vpack.c.b16 %v227, %v225
    %v282 = vpack.c.b16 %v230, %v228
    %v283 = vpack.c.b16 %v231, %v229
    %v284 = vpack.c.b16 %v234, %v232
    %v285 = vpack.c.b16 %v235, %v233
    %v286 = vpack.c.b16 %v238, %v236
    %v287 = vpack.c.b16 %v239, %v237
    %v288 = vpack.c.b16 %v242, %v240
    %v289 = vpack.c.b16 %v243, %v241
    %v290 = vpack.c.b16 %v246, %v244
    %v291 = vpack.c.b16 %v247, %v245
    %v292 = vpack.c.b16 %v250, %v248
    %v293 = vpack.c.b16 %v251, %v249
    %v294 = vpack.c.b16 %v254, %v252
    %v295 = vpack.c.b16 %v255, %v253
    %v296 = vpack.c.b16 %v258, %v256
    %v297 = vpack.c.b16 %v259, %v257
    %v298 = vpack.c.b16 %v262, %v260
    %v299 = vpack.c.b16 %v263, %v261
    %v300 = vpack.c.b16 %v266, %v264
    %v301 = vpack.c.b16 %v267, %v265
    %v302 = vpack.c.b16 %v270, %v268
    %v303 = vpack.c.b16 %v271, %v269
    %336 = vmatpush.bf16.msra.mxu0 %v286
    %337 = vmatpush.bf16.msra.mxu0 %v284
    %338 = vmatpush.bf16.msra.mxu0 %v282
    %339 = vmatpush.bf16.msra.mxu0 %v280
    %340 = vmatpush.bf16.msra.mxu0 %v278
    %341 = vmatpush.bf16.msra.mxu0 %v276
    %342 = vmatpush.bf16.msra.mxu0 %v274
    %343 = vmatpush.bf16.msra.mxu0 %v272
    %344 = vmatmul.bf16.gmra.mxu0 %v136
    %v345 = vpop.f32.mrf.mxu0
    %v346 = vadd.f32 %v172, %v345
    %v347 = vpop.f32.mrf.mxu0
    %348 = vdwg.mxu0
    %349 = vmatpush.bf16.msra.mxu0 %v302
    %350 = vmatpush.bf16.msra.mxu0 %v300
    %351 = vmatpush.bf16.msra.mxu0 %v298
    %352 = vmatpush.bf16.msra.mxu0 %v296
    %353 = vmatpush.bf16.msra.mxu0 %v294
    %354 = vmatpush.bf16.msra.mxu0 %v292
    %355 = vmatpush.bf16.msra.mxu0 %v290
    %356 = vmatpush.bf16.msra.mxu0 %v288
    %357 = vmatmul.bf16.gmra.mxu0 %v137
    %v358 = vpop.f32.mrf.mxu0
    %v359 = vadd.f32 %v346, %v358
    %v360 = vpop.f32.mrf.mxu0
    %361 = vdwg.mxu0
    %362 = vmatpush.bf16.msra.mxu0 %v287
    %363 = vmatpush.bf16.msra.mxu0 %v285
    %364 = vmatpush.bf16.msra.mxu0 %v283
    %365 = vmatpush.bf16.msra.mxu0 %v281
    %366 = vmatpush.bf16.msra.mxu0 %v279
    %367 = vmatpush.bf16.msra.mxu0 %v277
    %368 = vmatpush.bf16.msra.mxu0 %v275
    %369 = vmatpush.bf16.msra.mxu0 %v273
    %370 = vmatmul.bf16.gmra.mxu0 %v136
    %v371 = vpop.f32.mrf.mxu0
    %v372 = vadd.f32 %v173, %v371
    %v373 = vpop.f32.mrf.mxu0
    %374 = vdwg.mxu0
    %375 = vmatpush.bf16.msra.mxu0 %v303
    %376 = vmatpush.bf16.msra.mxu0 %v301
    %377 = vmatpush.bf16.msra.mxu0 %v299
    %378 = vmatpush.bf16.msra.mxu0 %v297
    %379 = vmatpush.bf16.msra.mxu0 %v295
    %380 = vmatpush.bf16.msra.mxu0 %v293
    %381 = vmatpush.bf16.msra.mxu0 %v291
    %382 = vmatpush.bf16.msra.mxu0 %v289
    %383 = vmatmul.bf16.gmra.mxu0 %v137
    %v384 = vpop.f32.mrf.mxu0
    %v385 = vadd.f32 %v372, %v384
    %v386 = vpop.f32.mrf.mxu0
    %387 = vdwg.mxu0
    %v388 = vmax.f32 %v359, 0.0
    %v389 = vmax.f32 %v385, 0.0
    %v390 = vld [vmem:[%s5] sm:$0xff]
    %v391 = vld [vmem:[%s5 + $0x8] sm:$0xff]
    %v392 = vld [vmem:[%s5 + $0x10] sm:$0xff]
    %v393 = vld [vmem:[%s5 + $0x18] sm:$0xff]
    %v394 = vld [vmem:[%s5 + $0x20] sm:$0xff]
    %v395 = vld [vmem:[%s5 + $0x28] sm:$0xff]
    %v396 = vld [vmem:[%s5 + $0x30] sm:$0xff]
    %v397 = vld [vmem:[%s5 + $0x38] sm:$0xff]
    %v398 = vld [vmem:[%s5 + $0x40] sm:$0xff]
    %v399 = vld [vmem:[%s5 + $0x48] sm:$0xff]
    %v400 = vld [vmem:[%s5 + $0x50] sm:$0xff]
    %v401 = vld [vmem:[%s5 + $0x58] sm:$0xff]
    %v402 = vld [vmem:[%s5 + $0x60] sm:$0xff]
    %v403 = vld [vmem:[%s5 + $0x68] sm:$0xff]
    %v404 = vld [vmem:[%s5 + $0x70] sm:$0xff]
    %v405 = vld [vmem:[%s5 + $0x78] sm:$0xff]
    %v406 = vld [vmem:[%s5 + $0x80] sm:$0xff]
    %v407 = vld [vmem:[%s5 + $0x88] sm:$0xff]
    %v408 = vld [vmem:[%s5 + $0x90] sm:$0xff]
    %v409 = vld [vmem:[%s5 + $0x98] sm:$0xff]
    %v410 = vld [vmem:[%s5 + $0xa0] sm:$0xff]
    %v411 = vld [vmem:[%s5 + $0xa8] sm:$0xff]
    %v412 = vld [vmem:[%s5 + $0xb0] sm:$0xff]
    %v413 = vld [vmem:[%s5 + $0xb8] sm:$0xff]
    %v414 = vld [vmem:[%s5 + $0xc0] sm:$0xff]
    %v415 = vld [vmem:[%s5 + $0xc8] sm:$0xff]
    %v416 = vld [vmem:[%s5 + $0xd0] sm:$0xff]
    %v417 = vld [vmem:[%s5 + $0xd8] sm:$0xff]
    %v418 = vld [vmem:[%s5 + $0xe0] sm:$0xff]
    %v419 = vld [vmem:[%s5 + $0xe8] sm:$0xff]
    %v420 = vld [vmem:[%s5 + $0xf0] sm:$0xff]
    %v421 = vld [vmem:[%s5 + $0xf8] sm:$0xff]
    %v422 = vld [vmem:[%s6] sm:$0x1]
    %v424 = vperm.slane %v422, 0
    %426 = vmatpush.msra.mxu0 %v405
    %427 = vmatpush.msra.mxu0 %v404
    %428 = vmatpush.msra.mxu0 %v403
    %429 = vmatpush.msra.mxu0 %v402
    %430 = vmatpush.msra.mxu0 %v401
    %431 = vmatpush.msra.mxu0 %v400
    %432 = vmatpush.msra.mxu0 %v399
    %433 = vmatpush.msra.mxu0 %v398
    %434 = vmatpush.msra.mxu0 %v397
    %435 = vmatpush.msra.mxu0 %v396
    %436 = vmatpush.msra.mxu0 %v395
    %437 = vmatpush.msra.mxu0 %v394
    %438 = vmatpush.msra.mxu0 %v393
    %439 = vmatpush.msra.mxu0 %v392
    %440 = vmatpush.msra.mxu0 %v391
    %441 = vmatpush.msra.mxu0 %v390
    %442 = vmatmul.f32.gmra.mxu0 %v388
    %v443 = vpop.f32.mrf.mxu0
    %v444 = vadd.f32 %v424, %v443
    %445 = vdwg.mxu0
    %446 = vmatpush.msra.mxu0 %v421
    %447 = vmatpush.msra.mxu0 %v420
    %448 = vmatpush.msra.mxu0 %v419
    %449 = vmatpush.msra.mxu0 %v418
    %450 = vmatpush.msra.mxu0 %v417
    %451 = vmatpush.msra.mxu0 %v416
    %452 = vmatpush.msra.mxu0 %v415
    %453 = vmatpush.msra.mxu0 %v414
    %454 = vmatpush.msra.mxu0 %v413
    %455 = vmatpush.msra.mxu0 %v412
    %456 = vmatpush.msra.mxu0 %v411
    %457 = vmatpush.msra.mxu0 %v410
    %458 = vmatpush.msra.mxu0 %v409
    %459 = vmatpush.msra.mxu0 %v408
    %460 = vmatpush.msra.mxu0 %v407
    %461 = vmatpush.msra.mxu0 %v406
    %462 = vmatmul.f32.gmra.mxu0 %v389
    %v463 = vpop.f32.mrf.mxu0
    %v464 = vadd.f32 %v444, %v463
    %465 = vdwg.mxu0
    %vm466 = vcmask 31744
    %467 = vst.msk [vmem:[%s7] sm:$0xff] %vm466, %v464
    // Predicated region
    $region38: #{tpu_custom_call.1} parent=1 // pred_check
      _
    $region39: #{tpu_custom_call.1} parent=1 // pred_check_branch
      %469 = sbr.rel (0) target = $region41
    $region40: #{tpu_custom_call.1} parent=1 // pred_region
      _
    $region41: #{tpu_custom_call.1} parent=1 // pred_fallthru
      _
    // Predicated region
    $region42: #{tpu_custom_call.1} parent=1 // pred_check
      _
    $region43: #{tpu_custom_call.1} parent=1 // pred_check_branch
      %471 = sbr.rel (0) target = $region45
    $region44: #{tpu_custom_call.1} parent=1 // pred_region
      _
    $region45: #{tpu_custom_call.1} parent=1 // pred_fallthru
      _
    %472 = vsyncpa [#allocation3], 1
    %473 = vsyncpa [#allocation5], 1

</llo_original>
